<compile_context>
chip_gen: v7x
topology: tpu7x:2x2x1
jax: 0.10.0
libtpu: 0.0.40
codegen_flags: <defaults>
</compile_context>

<pallas_src>
import functools

import jax
import jax.numpy as jnp
from jax.experimental import pallas as pl
from jax.experimental.pallas import tpu as pltpu

ALPHA = 0.1          # matches SelfKDLoss(alpha=0.1)
TEMPERATURE = 2.0    # matches SelfKDLoss(temperature=2)
IGNORE_INDEX = -1    # matches SelfKDLoss(ignore_index=-1)
_T_IS_2 = (TEMPERATURE == 2.0)


def _selfkd_partial_kernel(x_ref, y_ref, lbl_ref, o_ref, *, n_rows, has_tail):
    """Per-block partial sums for the SelfKD loss.

    x_ref:   (TM, C) student logits (caller dtype)
    y_ref:   (TM, C) teacher logits (caller dtype)
    lbl_ref: (TM, 1) int32 class labels (IGNORE_INDEX allowed)
    o_ref:   (1, 8, 128) f32; [0,0,0]=KL sum, [0,0,1]=CE sum, [0,0,2]=valid count.
    """
    tm = x_ref.shape[0]
    inv_t = 1.0 / TEMPERATURE

    x = x_ref[...].astype(jnp.float32)        # student logits
    y = y_ref[...].astype(jnp.float32)        # teacher logits
    lbl = lbl_ref[...]                        # (TM, 1) int32

    xs = x * inv_t
    ys = y * inv_t

    # Student: one max over x serves both the /T log-softmax (KL) and the
    # unscaled log-sum-exp (CE): max(xs) == max(x) * (1/T) for T > 0.
    mcx = jnp.max(x, axis=-1, keepdims=True)          # (TM, 1)
    mx = mcx * inv_t
    exp_s = jnp.exp(xs - mx)                          # (TM, C) -- only student exp
    zx = jnp.sum(exp_s, axis=-1, keepdims=True)
    log_zx = jnp.log(zx)

    # Teacher softmax statistics (log kept analytic: safe when p underflows).
    my = jnp.max(ys, axis=-1, keepdims=True)
    ey = jnp.exp(ys - my)                             # (TM, C)
    zy = jnp.sum(ey, axis=-1, keepdims=True)
    log_zy = jnp.log(zy)

    # Fused KL: sum_j p_j*(log p_j - log q_j)
    #         = sum_j p_j*(ys_j - xs_j) + (mx + log zx - my - log zy)
    # with p = ey / zy (division folded into a (TM,1) per-row divide).
    wsum = jnp.sum(ey * (ys - xs), axis=-1, keepdims=True)
    kl_rows = wsum / zy + (mx + log_zx - my - log_zy)          # (TM, 1)

    # Cross-entropy: lse(x) - x[label].  For T == 2, exp(x - mcx) == exp_s**2,
    # replacing a third exp pass with a VPU square.
    if _T_IS_2:
        exp_c = exp_s * exp_s
    else:
        exp_c = jnp.exp(x - mcx)
    lse = mcx + jnp.log(jnp.sum(exp_c, axis=-1, keepdims=True))
    cls_ids = jax.lax.broadcasted_iota(jnp.int32, x.shape, 1)
    picked = jnp.sum(jnp.where(cls_ids == lbl, x, 0.0), axis=-1, keepdims=True)
    valid = lbl != IGNORE_INDEX
    ce_rows = jnp.where(valid, lse - picked, 0.0)              # (TM, 1)
    valid_rows = valid.astype(jnp.float32)

    # Ragged tail (statically known): row-level SELECT on the (TM,1) results,
    # exact even if padded rows carry NaN/Inf garbage. Never a multiply.
    if has_tail:
        i = pl.program_id(0)
        row_ids = i * tm + jax.lax.broadcasted_iota(jnp.int32, (tm, 1), 0)
        row_ok = row_ids < n_rows
        kl_rows = jnp.where(row_ok, kl_rows, 0.0)
        ce_rows = jnp.where(row_ok, ce_rows, 0.0)
        valid_rows = jnp.where(row_ok, valid_rows, 0.0)

    kl_sum = jnp.sum(kl_rows)
    ce_sum = jnp.sum(ce_rows)
    cnt_sum = jnp.sum(valid_rows)

    # Lane-dense (1, 8, 128) partial-sum tile for this block (unmasked store).
    sub = jax.lax.broadcasted_iota(jnp.int32, (1, 8, 128), 1)
    lane = jax.lax.broadcasted_iota(jnp.int32, (1, 8, 128), 2)
    first = sub == 0
    o_ref[...] = jnp.where(
        first & (lane == 0), kl_sum,
        jnp.where(first & (lane == 1), ce_sum,
                  jnp.where(first & (lane == 2), cnt_sum, 0.0)))


def _vmem_capacity_bytes():
    """Physical per-core VMEM capacity, with a conservative fallback (v7x)."""
    try:
        info = pltpu.get_tpu_info()
        for attr in ("vmem_capacity_bytes", "vmem_bytes", "vmem_size_bytes"):
            v = getattr(info, attr, None)
            if v:
                return int(v)
    except Exception:
        pass
    return 64 * 1024 * 1024


def _choose_tile_rows(n_rows, n_cls, itemsize, vmem_limit, max_tile_rows=4096):
    """Largest row-tile whose pipeline buffers + f32 temporaries fit VMEM."""
    # Per tile row: 2 logit streams x 2 pipeline buffers x itemsize (auto
    # double-buffered by BlockSpec) + ~6 live (TM, C) f32 temporaries in-body.
    per_row = max(n_cls, 1) * (2 * 2 * itemsize + 6 * 4)
    budget = int(vmem_limit * 0.8)
    tr = budget // per_row
    tr = max(8, (tr // 8) * 8)
    tr = min(tr, max_tile_rows)
    if n_rows <= tr:
        return n_rows            # single full block; block dim == full dim is legal
    # TODO(synk): add a C-axis (online-softmax) tiling path for vocab-scale
    # class counts where even an 8-row tile would blow the VMEM budget.
    nb = pl.cdiv(n_rows, tr)
    if nb > 1 and nb % 2 == 1:   # best effort: even block count feeds both v7x TCs
        nb += 1
        tr = max(8, ((pl.cdiv(n_rows, nb) + 7) // 8) * 8)
    return tr


@functools.partial(jax.jit, static_argnums=(3, 4))
def _self_kd_loss_impl(outputs, teacher_outputs, labels2d, tile_rows, vmem_limit):
    n, c = outputs.shape
    num_blocks = pl.cdiv(n, tile_rows)
    has_tail = (n % tile_rows) != 0

    kernel = functools.partial(_selfkd_partial_kernel, n_rows=n, has_tail=has_tail)
    partials = pl.pallas_call(
        kernel,
        out_shape=jax.ShapeDtypeStruct((num_blocks, 8, 128), jnp.float32),
        grid_spec=pl.GridSpec(
            grid=(num_blocks,),
            in_specs=[
                pl.BlockSpec((tile_rows, c), lambda i: (i, 0)),
                pl.BlockSpec((tile_rows, c), lambda i: (i, 0)),
                pl.BlockSpec((tile_rows, 1), lambda i: (i, 0)),
            ],
            out_specs=pl.BlockSpec((1, 8, 128), lambda i: (i, 0, 0)),
        ),
        compiler_params=pltpu.CompilerParams(
            dimension_semantics=("parallel",),
            vmem_limit_bytes=int(vmem_limit),
        ),
    )(outputs, teacher_outputs, labels2d)

    sums = jnp.sum(partials, axis=(0, 1))       # (128,): only lanes 0..2 nonzero
    kl_sum, ce_sum, valid_cnt = sums[0], sums[1], sums[2]

    kl_mean = kl_sum / (n * c)                  # KLDivLoss(reduction='mean')
    ce_mean = ce_sum / valid_cnt                # NaN if all labels ignored (matches PyTorch)
    loss = (kl_mean * (ALPHA * TEMPERATURE * TEMPERATURE)
            + ce_mean * (1.0 - ALPHA))
    return loss.astype(jnp.float32)


def self_kd_loss(outputs, teacher_outputs, labels):
    """SelfKDLoss.forward(outputs, teacher_outputs, labels); alpha=0.1, T=2.

    Logits may be f32 or bf16: they stream to the kernel in their caller dtype
    (halves HBM traffic for bf16); all math inside the kernel is f32.
    """
    n, c = outputs.shape
    assert teacher_outputs.shape == (n, c)
    labels2d = labels.astype(jnp.int32).reshape(n, 1)

    itemsize = outputs.dtype.itemsize
    vmem_cap = _vmem_capacity_bytes()
    vmem_limit = int(vmem_cap * 0.75)           # explicit scoped limit, with headroom
    tile_rows = _choose_tile_rows(n, c, itemsize, vmem_limit)
    return _self_kd_loss_impl(outputs, teacher_outputs, labels2d, tile_rows, vmem_limit)


def _reference(outputs, teacher_outputs, labels):
    t = TEMPERATURE
    log_q = jax.nn.log_softmax(outputs / t, axis=-1)
    p = jax.nn.softmax(teacher_outputs / t, axis=-1)
    log_p = jax.nn.log_softmax(teacher_outputs / t, axis=-1)
    kl_mean = jnp.mean(jnp.where(p > 0, p * (log_p - log_q), 0.0))

    n, c = outputs.shape
    lse = jax.nn.logsumexp(outputs, axis=-1)
    safe = jnp.clip(labels, 0, c - 1)
    picked = jnp.take_along_axis(outputs, safe[:, None], axis=-1)[:, 0]
    valid = labels != IGNORE_INDEX
    ce_mean = jnp.sum(jnp.where(valid, lse - picked, 0.0)) / jnp.sum(valid)

    return kl_mean * (ALPHA * t * t) + ce_mean * (1.0 - ALPHA)


if __name__ == "__main__":
    key = jax.random.PRNGKey(0)
    k1, k2, k3 = jax.random.split(key, 3)

    # Classifier-style inputs implied by the forward: (N, C) logits + (N,) labels.
    # N = batch 2 x seq 8 rows flattened, C = 32 classes.
    N, C = 16, 32
    outputs = jax.random.normal(k1, (N, C), dtype=jnp.float32) * 2.0
    teacher = jax.random.normal(k2, (N, C), dtype=jnp.float32) * 2.0
    labels = jax.random.randint(k3, (N,), 0, C, dtype=jnp.int32)
    labels = labels.at[3].set(IGNORE_INDEX)   # exercise the ignore_index path

    out = jax.block_until_ready(self_kd_loss(outputs, teacher, labels))
    ref = _reference(outputs, teacher, labels)
    assert jnp.allclose(out, ref, atol=1e-5, rtol=1e-5), (out, ref)
    print("KERNEL_OK")
</pallas_src>

<mosaic_0001>
module attributes {stable_mosaic.version = 11 : i64} {
  func.func @_selfkd_partial_kernel(%arg0: i32, %arg1: memref<16x32xf32, #tpu.memory_space<vmem>>, %arg2: memref<16x32xf32, #tpu.memory_space<vmem>>, %arg3: memref<16x1xi32, #tpu.memory_space<vmem>>, %arg4: memref<1x8x128xf32, #tpu.memory_space<vmem>>) attributes {dimension_semantics = [#tpu.dimension_semantics<parallel>], iteration_bounds = array<i64: 1>, scalar_prefetch = 0 : i64, scratch_operands = 0 : i64, tpu.core_type = #tpu.core_type<tc>, window_params = [{transform_indices = @transform_0, window_bounds = array<i64: 16, 32>}, {transform_indices = @transform_1, window_bounds = array<i64: 16, 32>}, {transform_indices = @transform_2, window_bounds = array<i64: 16, 1>}, {transform_indices = @transform_3, window_bounds = array<i64: 1, 8, 128>}]} {
    %c0 = arith.constant 0 : index
    %c0_0 = arith.constant 0 : index
    %0 = vector.load %arg1[%c0, %c0_0] : memref<16x32xf32, #tpu.memory_space<vmem>>, vector<16x32xf32>
    %c0_1 = arith.constant 0 : index
    %c0_2 = arith.constant 0 : index
    %1 = vector.load %arg2[%c0_1, %c0_2] : memref<16x32xf32, #tpu.memory_space<vmem>>, vector<16x32xf32>
    %c0_3 = arith.constant 0 : index
    %c0_4 = arith.constant 0 : index
    %2 = vector.load %arg3[%c0_3, %c0_4] : memref<16x1xi32, #tpu.memory_space<vmem>>, vector<16x1xi32>
    %cst = arith.constant 5.000000e-01 : f32
    %3 = vector.broadcast %cst : f32 to vector<16x32xf32>
    %4 = arith.mulf %0, %3 : vector<16x32xf32>
    %cst_5 = arith.constant 5.000000e-01 : f32
    %5 = vector.broadcast %cst_5 : f32 to vector<16x32xf32>
    %6 = arith.mulf %1, %5 : vector<16x32xf32>
    %cst_6 = arith.constant dense<0xFF800000> : vector<16xf32>
    %7 = vector.multi_reduction <maximumf>, %0, %cst_6 [1] : vector<16x32xf32> to vector<16xf32>
    %8 = vector.shape_cast %7 : vector<16xf32> to vector<16x1xf32>
    %cst_7 = arith.constant 5.000000e-01 : f32
    %9 = vector.broadcast %cst_7 : f32 to vector<16x1xf32>
    %10 = arith.mulf %8, %9 : vector<16x1xf32>
    %11 = vector.broadcast %10 : vector<16x1xf32> to vector<16x32xf32>
    %12 = arith.subf %4, %11 : vector<16x32xf32>
    %13 = math.exp %12 : vector<16x32xf32>
    %cst_8 = arith.constant dense<0.000000e+00> : vector<16xf32>
    %14 = vector.multi_reduction <add>, %13, %cst_8 [1] : vector<16x32xf32> to vector<16xf32>
    %15 = vector.shape_cast %14 : vector<16xf32> to vector<16x1xf32>
    %16 = math.log %15 : vector<16x1xf32>
    %cst_9 = arith.constant dense<0xFF800000> : vector<16xf32>
    %17 = vector.multi_reduction <maximumf>, %6, %cst_9 [1] : vector<16x32xf32> to vector<16xf32>
    %18 = vector.shape_cast %17 : vector<16xf32> to vector<16x1xf32>
    %19 = vector.broadcast %18 : vector<16x1xf32> to vector<16x32xf32>
    %20 = arith.subf %6, %19 : vector<16x32xf32>
    %21 = math.exp %20 : vector<16x32xf32>
    %cst_10 = arith.constant dense<0.000000e+00> : vector<16xf32>
    %22 = vector.multi_reduction <add>, %21, %cst_10 [1] : vector<16x32xf32> to vector<16xf32>
    %23 = vector.shape_cast %22 : vector<16xf32> to vector<16x1xf32>
    %24 = math.log %23 : vector<16x1xf32>
    %25 = arith.subf %6, %4 : vector<16x32xf32>
    %26 = arith.mulf %21, %25 : vector<16x32xf32>
    %cst_11 = arith.constant dense<0.000000e+00> : vector<16xf32>
    %27 = vector.multi_reduction <add>, %26, %cst_11 [1] : vector<16x32xf32> to vector<16xf32>
    %28 = vector.shape_cast %27 : vector<16xf32> to vector<16x1xf32>
    %29 = arith.divf %28, %23 : vector<16x1xf32>
    %30 = arith.addf %10, %16 : vector<16x1xf32>
    %31 = arith.subf %30, %18 : vector<16x1xf32>
    %32 = arith.subf %31, %24 : vector<16x1xf32>
    %33 = arith.addf %29, %32 : vector<16x1xf32>
    %34 = arith.mulf %13, %13 : vector<16x32xf32>
    %cst_12 = arith.constant dense<0.000000e+00> : vector<16xf32>
    %35 = vector.multi_reduction <add>, %34, %cst_12 [1] : vector<16x32xf32> to vector<16xf32>
    %36 = vector.shape_cast %35 : vector<16xf32> to vector<16x1xf32>
    %37 = math.log %36 : vector<16x1xf32>
    %38 = arith.addf %8, %37 : vector<16x1xf32>
    %39 = tpu.iota {dimensions = array<i32: 1>} : vector<16x32xi32>
    %40 = vector.broadcast %2 : vector<16x1xi32> to vector<16x32xi32>
    %41 = arith.cmpi eq, %39, %40 : vector<16x32xi32>
    %cst_13 = arith.constant 0.000000e+00 : f32
    %42 = vector.broadcast %cst_13 : f32 to vector<16x32xf32>
    %43 = arith.select %41, %0, %42 : vector<16x32xi1>, vector<16x32xf32>
    %cst_14 = arith.constant dense<0.000000e+00> : vector<16xf32>
    %44 = vector.multi_reduction <add>, %43, %cst_14 [1] : vector<16x32xf32> to vector<16xf32>
    %45 = vector.shape_cast %44 : vector<16xf32> to vector<16x1xf32>
    %c-1_i32 = arith.constant -1 : i32
    %46 = vector.broadcast %c-1_i32 : i32 to vector<16x1xi32>
    %47 = arith.cmpi ne, %2, %46 : vector<16x1xi32>
    %48 = arith.subf %38, %45 : vector<16x1xf32>
    %cst_15 = arith.constant 0.000000e+00 : f32
    %49 = vector.broadcast %cst_15 : f32 to vector<16x1xf32>
    %50 = arith.select %47, %48, %49 : vector<16x1xi1>, vector<16x1xf32>
    %51 = arith.extui %47 : vector<16x1xi1> to vector<16x1xi32>
    %52 = arith.sitofp %51 : vector<16x1xi32> to vector<16x1xf32>
    %53 = vector.shape_cast %33 : vector<16x1xf32> to vector<1x16x1xf32>
    %cst_16 = arith.constant dense<0.000000e+00> : vector<1xf32>
    %54 = vector.multi_reduction <add>, %53, %cst_16 [1, 2] : vector<1x16x1xf32> to vector<1xf32>
    %55 = vector.shape_cast %54 : vector<1xf32> to vector<1x1x1xf32>
    %56 = vector.extract %55[0, 0, 0] : f32 from vector<1x1x1xf32>
    %57 = vector.shape_cast %50 : vector<16x1xf32> to vector<1x16x1xf32>
    %cst_17 = arith.constant dense<0.000000e+00> : vector<1xf32>
    %58 = vector.multi_reduction <add>, %57, %cst_17 [1, 2] : vector<1x16x1xf32> to vector<1xf32>
    %59 = vector.shape_cast %58 : vector<1xf32> to vector<1x1x1xf32>
    %60 = vector.extract %59[0, 0, 0] : f32 from vector<1x1x1xf32>
    %61 = vector.shape_cast %52 : vector<16x1xf32> to vector<1x16x1xf32>
    %cst_18 = arith.constant dense<0.000000e+00> : vector<1xf32>
    %62 = vector.multi_reduction <add>, %61, %cst_18 [1, 2] : vector<1x16x1xf32> to vector<1xf32>
    %63 = vector.shape_cast %62 : vector<1xf32> to vector<1x1x1xf32>
    %64 = vector.extract %63[0, 0, 0] : f32 from vector<1x1x1xf32>
    %65 = tpu.iota {dimensions = array<i32: 1>} : vector<1x8x128xi32>
    %66 = tpu.iota {dimensions = array<i32: 2>} : vector<1x8x128xi32>
    %c0_i32 = arith.constant 0 : i32
    %67 = vector.broadcast %c0_i32 : i32 to vector<1x8x128xi32>
    %68 = arith.cmpi eq, %65, %67 : vector<1x8x128xi32>
    %c0_i32_19 = arith.constant 0 : i32
    %69 = vector.broadcast %c0_i32_19 : i32 to vector<1x8x128xi32>
    %70 = arith.cmpi eq, %66, %69 : vector<1x8x128xi32>
    %71 = arith.andi %68, %70 : vector<1x8x128xi1>
    %c1_i32 = arith.constant 1 : i32
    %72 = vector.broadcast %c1_i32 : i32 to vector<1x8x128xi32>
    %73 = arith.cmpi eq, %66, %72 : vector<1x8x128xi32>
    %74 = arith.andi %68, %73 : vector<1x8x128xi1>
    %c2_i32 = arith.constant 2 : i32
    %75 = vector.broadcast %c2_i32 : i32 to vector<1x8x128xi32>
    %76 = arith.cmpi eq, %66, %75 : vector<1x8x128xi32>
    %77 = arith.andi %68, %76 : vector<1x8x128xi1>
    %cst_20 = arith.constant 0.000000e+00 : f32
    %78 = vector.broadcast %64 : f32 to vector<1x8x128xf32>
    %79 = vector.broadcast %cst_20 : f32 to vector<1x8x128xf32>
    %80 = arith.select %77, %78, %79 : vector<1x8x128xi1>, vector<1x8x128xf32>
    %81 = vector.broadcast %60 : f32 to vector<1x8x128xf32>
    %82 = arith.select %74, %81, %80 : vector<1x8x128xi1>, vector<1x8x128xf32>
    %83 = vector.broadcast %56 : f32 to vector<1x8x128xf32>
    %84 = arith.select %71, %83, %82 : vector<1x8x128xi1>, vector<1x8x128xf32>
    %c0_21 = arith.constant 0 : index
    %c0_22 = arith.constant 0 : index
    %c0_23 = arith.constant 0 : index
    %85 = vector.load %arg4[%c0_21, %c0_22, %c0_23] : memref<1x8x128xf32, #tpu.memory_space<vmem>>, vector<1x8x128xf32>
    tpu.vector_store %arg4[%c0_21, %c0_22, %c0_23], %84 {strides = array<i32>} : memref<1x8x128xf32, #tpu.memory_space<vmem>>, vector<1x8x128xf32>,
    return
  }
  func.func @transform_0(%arg0: i32) -> (i32, i32) {
    %c0_i32 = arith.constant 0 : i32
    %c0_i32_0 = arith.constant 0 : i32
    return %arg0, %c0_i32 : i32, i32
  }
  func.func @transform_1(%arg0: i32) -> (i32, i32) {
    %c0_i32 = arith.constant 0 : i32
    %c0_i32_0 = arith.constant 0 : i32
    return %arg0, %c0_i32 : i32, i32
  }
  func.func @transform_2(%arg0: i32) -> (i32, i32) {
    %c0_i32 = arith.constant 0 : i32
    %c0_i32_0 = arith.constant 0 : i32
    return %arg0, %c0_i32 : i32, i32
  }
  func.func @transform_3(%arg0: i32) -> (i32, i32, i32) {
    %c0_i32 = arith.constant 0 : i32
    %c0_i32_0 = arith.constant 0 : i32
    %c0_i32_1 = arith.constant 0 : i32
    return %arg0, %c0_i32, %c0_i32_0 : i32, i32, i32
  }
}

</mosaic_0001>

<llo_original>
// kernel: _self_kd_loss_impl.1
$region0: #{_self_kd_loss_impl.1}
  #allocation0 [shape = 'u32[]', space=smem, size = 0x4, offset = 0x4, fixed_abs, tag = 'smem constant byte address 0x4 - core index']
  #allocation1 [shape = 'u32[144,128]{1,0:T(1,128)}', space=vmem, size = 0x12000, scoped, tag = 'internal scratch']
  %s0 = inlined_call_operand.vmem [shape: f32[16,32], index: 0, kind: input, shape index: {}]
  %s1 = inlined_call_operand.hbm [shape: f32[16,32], index: 1, kind: input, shape index: {}]
  %s2 = inlined_call_operand.vmem [shape: s32[16,1], index: 2, kind: input, shape index: {}]
  %s3 = inlined_call_operand.vmem [shape: f32[1,8,128], index: 3, kind: output, shape index: {}]
  %s4 = sld [smem:[#allocation0]]
  $region26: #{_self_kd_loss_impl.1} parent=0
    _
  %s6 = ssub.s32 1, %s4
  %s7 = scalar_select 0, %s6, %s4
  $region1: #{_self_kd_loss_impl.1} parent=0
    #allocation2 [shape = 'u8[8192]{0}', space=vmem, size = 0x2000, scoped, tag = 'input window, operand 1, single buffered']
    #allocation3 [shape = 's32[1]{0}', space=sflag, size = 0x4, scoped, tag = 'scoped memory for _self_kd_loss_impl.1']
    %8 = vsyncpa [#allocation3], 0
    // Predicated region
    $region2: #{_self_kd_loss_impl.1} parent=1 // pred_check
      _
    $region3: #{_self_kd_loss_impl.1} parent=1 // pred_check_branch
      %10 = sbr.rel (0) target = $region5
    $region4: #{_self_kd_loss_impl.1} parent=1 // pred_region
      _
    $region5: #{_self_kd_loss_impl.1} parent=1 // pred_fallthru
      _
    // Predicated region
    $region6: #{_self_kd_loss_impl.1} parent=1 // pred_check
      _
    $region7: #{_self_kd_loss_impl.1} parent=1 // pred_check_branch
      %12 = sbr.rel (0) target = $region9
    $region8: #{_self_kd_loss_impl.1} parent=1 // pred_region
      %s14 = ssub.s32 256, 256
      %15 = vsyncadd [#allocation3], %s14
      %s16 = sshll.u32 [#allocation2], 4
      %s17 = int_to_ptr.vmem [resolvable:$true] %s16
      %22 = dma.hbm_to_vmem [thread:$0]  %s1, 256, %s17, [#allocation3], 128, 128, 8
    $region9: #{_self_kd_loss_impl.1} parent=1 // pred_fallthru
      _
    // Predicated region
    $region10: #{_self_kd_loss_impl.1} parent=1 // pred_check
      _
    $region11: #{_self_kd_loss_impl.1} parent=1 // pred_check_branch
      %24 = sbr.rel (0) target = $region13
    $region12: #{_self_kd_loss_impl.1} parent=1 // pred_region
      _
    $region13: #{_self_kd_loss_impl.1} parent=1 // pred_fallthru
      _
    // Predicated region
    $region14: #{_self_kd_loss_impl.1} parent=1 // pred_check
      _
    $region15: #{_self_kd_loss_impl.1} parent=1 // pred_check_branch
      %26 = sbr.rel (0) target = $region17
    $region16: #{_self_kd_loss_impl.1} parent=1 // pred_region
      %27 = dma.done [#allocation3], 256
    $region17: #{_self_kd_loss_impl.1} parent=1 // pred_fallthru
      _
    %v28 = vld [vmem:[%s0] sm:$0xff]
    %v29 = vld [vmem:[%s0 + $0x8] sm:$0xff]
    %v30 = vld [vmem:[#allocation2] sm:$0xff]
    %v31 = vld [vmem:[#allocation2 + $0x8] sm:$0xff]
    %v32 = vld [vmem:[%s2] sm:$0xff]
    %v33 = vld [vmem:[%s2 + $0x8] sm:$0xff]
    %v34 = vmul.f32 %v28, 0.5
    %v35 = vmul.f32 %v29, 0.5
    %v36 = vmul.f32 %v30, 0.5
    %v37 = vmul.f32 %v31, 0.5
    %vm38 = vcmask 261120
    %v39 = vsel %vm38, %v28, -inf
    %40 = vmax.xlane.f32.xlu0 %v39
    %v41 = vpop.xlane.xlu0 %40
    %v42 = vsel %vm38, %v29, -inf
    %43 = vmax.xlane.f32.xlu0 %v42
    %v44 = vpop.xlane.xlu0 %43
    %v45 = vmul.f32 %v41, 0.5
    %v46 = vmul.f32 %v44, 0.5
    %v47 = vsub.f32 %v34, %v45
    %v48 = vsub.f32 %v35, %v46
    %v49 = vmul.f32 %v47, 1.442695
    %v50 = vpow.pop %v49
    %v51 = vmul.f32 %v48, 1.442695
    %v52 = vpow.pop %v51
    %v53 = vsel %vm38, %v50, 0.0
    %54 = vadd.xlane.f32.xlu0 %v53
    %v55 = vpop.xlane.xlu0 %54
    %v56 = vsel %vm38, %v52, 0.0
    %57 = vadd.xlane.f32.xlu0 %v56
    %v58 = vpop.xlane.xlu0 %57
    %v59 = vlog2.pop %v55
    %v60 = vmul.f32 %v59, 0.6931472
    %v61 = vlog2.pop %v58
    %v62 = vmul.f32 %v61, 0.6931472
    %v63 = vsel %vm38, %v36, -inf
    %64 = vmax.xlane.f32.xlu0 %v63
    %v65 = vpop.xlane.xlu0 %64
    %v66 = vsel %vm38, %v37, -inf
    %67 = vmax.xlane.f32.xlu0 %v66
    %v68 = vpop.xlane.xlu0 %67
    %v69 = vsub.f32 %v36, %v65
    %v70 = vsub.f32 %v37, %v68
    %v71 = vmul.f32 %v69, 1.442695
    %v72 = vpow.pop %v71
    %v73 = vmul.f32 %v70, 1.442695
    %v74 = vpow.pop %v73
    %v75 = vsel %vm38, %v72, 0.0
    %76 = vadd.xlane.f32.xlu0 %v75
    %v77 = vpop.xlane.xlu0 %76
    %v78 = vsel %vm38, %v74, 0.0
    %79 = vadd.xlane.f32.xlu0 %v78
    %v80 = vpop.xlane.xlu0 %79
    %v81 = vlog2.pop %v77
    %v82 = vmul.f32 %v81, 0.6931472
    %v83 = vlog2.pop %v80
    %v84 = vmul.f32 %v83, 0.6931472
    %v85 = vsub.f32 %v36, %v34
    %v86 = vsub.f32 %v37, %v35
    %v87 = vmul.f32 %v72, %v85
    %v88 = vmul.f32 %v74, %v86
    %v89 = vsel %vm38, %v87, 0.0
    %90 = vadd.xlane.f32.xlu0 %v89
    %v91 = vpop.xlane.xlu0 %90
    %v92 = vsel %vm38, %v88, 0.0
    %93 = vadd.xlane.f32.xlu0 %v92
    %v94 = vpop.xlane.xlu0 %93
    %v95 = vrcp.pop %v77
    %v96 = vmul.f32 %v91, %v95
    %v97 = vrcp.pop %v80
    %v98 = vmul.f32 %v94, %v97
    %v99 = vadd.f32 %v45, %v60
    %v100 = vadd.f32 %v46, %v62
    %v101 = vsub.f32 %v99, %v65
    %v102 = vsub.f32 %v100, %v68
    %v103 = vsub.f32 %v101, %v82
    %v104 = vsub.f32 %v102, %v84
    %v105 = vadd.f32 %v96, %v103
    %v106 = vadd.f32 %v98, %v104
    %v107 = vmul.f32 %v50, %v50
    %v108 = vmul.f32 %v52, %v52
    %v109 = vsel %vm38, %v107, 0.0
    %110 = vadd.xlane.f32.xlu0 %v109
    %v111 = vpop.xlane.xlu0 %110
    %v112 = vsel %vm38, %v108, 0.0
    %113 = vadd.xlane.f32.xlu0 %v112
    %v114 = vpop.xlane.xlu0 %113
    %v115 = vlog2.pop %v111
    %v116 = vmul.f32 %v115, 0.6931472
    %v117 = vlog2.pop %v114
    %v118 = vmul.f32 %v117, 0.6931472
    %v119 = vadd.f32 %v41, %v116
    %v120 = vadd.f32 %v44, %v118
    %v121 = vlaneseq
    %v122 = vand.u32 %v121, 127
    %123 = vset.pattern.permute.xlu0 0
    %124 = vperm.xlu0 %123, %v32
    %v125 = vpop.permute.xlu0 %124
    %126 = vset.pattern.permute.xlu0 0
    %127 = vperm.xlu0 %126, %v33
    %v128 = vpop.permute.xlu0 %127
    %vm129 = vcmp.eq.s32.totalorder %v122, %v125
    %vm130 = vcmp.eq.s32.totalorder %v122, %v128
    %v131 = vsel %vm129, %v28, 0.0
    %v132 = vsel %vm130, %v29, 0.0
    %v133 = vsel %vm38, %v131, 0.0
    %134 = vadd.xlane.f32.xlu0 %v133
    %v135 = vpop.xlane.xlu0 %134
    %v136 = vsel %vm38, %v132, 0.0
    %137 = vadd.xlane.f32.xlu0 %v136
    %v138 = vpop.xlane.xlu0 %137
    %vm139 = vcmp.ne.s32.totalorder %v32, 4294967295
    %vm140 = vcmp.ne.s32.totalorder %v33, 4294967295
    %v141 = vsub.f32 %v119, %v135
    %v142 = vsub.f32 %v120, %v138
    %v143 = vsel %vm139, %v141, 0.0
    %v144 = vsel %vm140, %v142, 0.0
    %v145 = vsel %vm139, 1, 0
    %v146 = vsel %vm140, 1, 0
    %v147 = vcvt.s32.f32 %v145
    %v148 = vcvt.s32.f32 %v146
    %vm149 = vcmask 7168
    %v150 = vsel %vm149, %v105, 0.0
    %v151 = vsel %vm149, %v106, 0.0
    %v152 = vadd.f32 %v150, %v151
    %153 = vadd.xlane.f32.xlu0 %v152
    %v154 = vpop.xlane.xlu0 %153
    %v155 = vrot.slane %v154, 4
    %v156 = vadd.f32 %v154, %v155
    %v157 = vrot.slane %v156, 2
    %v158 = vadd.f32 %v156, %v157
    %v159 = vrot.slane %v158, 1
    %v160 = vadd.f32 %v158, %v159
    %s161 = vtos %v160
    %v162 = vsel %vm149, %v143, 0.0
    %v163 = vsel %vm149, %v144, 0.0
    %v164 = vadd.f32 %v162, %v163
    %165 = vadd.xlane.f32.xlu0 %v164
    %v166 = vpop.xlane.xlu0 %165
    %v167 = vrot.slane %v166, 4
    %v168 = vadd.f32 %v166, %v167
    %v169 = vrot.slane %v168, 2
    %v170 = vadd.f32 %v168, %v169
    %v171 = vrot.slane %v170, 1
    %v172 = vadd.f32 %v170, %v171
    %s173 = vtos %v172
    %v174 = vsel %vm149, %v147, 0.0
    %v175 = vsel %vm149, %v148, 0.0
    %v176 = vadd.f32 %v174, %v175
    %177 = vadd.xlane.f32.xlu0 %v176
    %v178 = vpop.xlane.xlu0 %177
    %v179 = vrot.slane %v178, 4
    %v180 = vadd.f32 %v178, %v179
    %v181 = vrot.slane %v180, 2
    %v182 = vadd.f32 %v180, %v181
    %v183 = vrot.slane %v182, 1
    %v184 = vadd.f32 %v182, %v183
    %s185 = vtos %v184
    %v186 = vlaneseq
    %v187 = vshrl.u32 %v186, 7
    %vm188 = vcmp.eq.s32.totalorder %v187, 0
    %vm189 = vcmp.eq.s32.totalorder %v122, 0
    %vm190 = vmand %vm188, %vm189
    %vm191 = vcmp.eq.s32.totalorder %v122, 1
    %vm192 = vmand %vm188, %vm191
    %vm193 = vcmp.eq.s32.totalorder %v122, 2
    %vm194 = vmand %vm188, %vm193
    %v195 = vstv %s185
    %v196 = vsel %vm194, %v195, 0.0
    %v197 = vstv %s173
    %v198 = vsel %vm192, %v197, %v196
    %v199 = vstv %s161
    %v200 = vsel %vm190, %v199, %v198
    %201 = vst [vmem:[%s3] sm:$0xff] %v200
    // Predicated region
    $region18: #{_self_kd_loss_impl.1} parent=1 // pred_check
      _
    $region19: #{_self_kd_loss_impl.1} parent=1 // pred_check_branch
      %203 = sbr.rel (0) target = $region21
    $region20: #{_self_kd_loss_impl.1} parent=1 // pred_region
      _
    $region21: #{_self_kd_loss_impl.1} parent=1 // pred_fallthru
      _
    // Predicated region
    $region22: #{_self_kd_loss_impl.1} parent=1 // pred_check
      _
    $region23: #{_self_kd_loss_impl.1} parent=1 // pred_check_branch
      %205 = sbr.rel (0) target = $region25
    $region24: #{_self_kd_loss_impl.1} parent=1 // pred_region
      _
    $region25: #{_self_kd_loss_impl.1} parent=1 // pred_fallthru
      _
    %206 = vsyncpa [#allocation3], 1

</llo_original>
